<compile_context>
chip_gen: v6e
topology: v6e:2x2x1
jax: 0.10.0
libtpu: 0.0.40
codegen_flags: <defaults>
</compile_context>

<pallas_src>
import functools

import jax
import jax.numpy as jnp
from jax import lax
from jax.experimental import pallas as pl
from jax.experimental.pallas import tpu as pltpu

_SUB = 8
_LANE = 128
_TARGET_TILE_BYTES = 4 * 1024 * 1024   # per-input DMA bytes per grid step
_VMEM_LIMIT_BYTES = 32 * 1024 * 1024   # 2 inputs x 2 bufs x 4 MiB + headroom


def _dice_kernel(pd_ref, gt_ref, acc_ref, *, rows, block_rows, chunk_rows,
                 num_blocks, needs_mask):
    """Accumulate (sum(pd*gt), sum(pd), sum(gt)) into a resident (3,8,128) block.

    pd_ref, gt_ref : (block_rows, 128) VMEM tiles in the inputs' native dtype
    acc_ref        : (3, 8, 128) f32 output block, resident across the
                     "arbitrary" grid axis -> vector accumulator.
    """
    k = pl.program_id(0)

    @pl.when(k == 0)
    def _init():
        acc_ref[...] = jnp.zeros_like(acc_ref)

    n_chunks = block_rows // chunk_rows

    def _reduce(x):
        # (chunk_rows, 128) -> (8, 128): pure vreg adds, no cross-lane work.
        return x.reshape(-1, _SUB, _LANE).sum(axis=0)

    def _accumulate(masked):
        def body(i, carry):
            r0 = pl.multiple_of(i * chunk_rows, chunk_rows)
            pd = pd_ref[pl.ds(r0, chunk_rows), :].astype(jnp.float32)
            gt = gt_ref[pl.ds(r0, chunk_rows), :].astype(jnp.float32)
            if masked:
                row = (k * block_rows + r0
                       + lax.broadcasted_iota(jnp.int32, (chunk_rows, _LANE), 0))
                keep = row < rows
                pd = jnp.where(keep, pd, 0.0)
                gt = jnp.where(keep, gt, 0.0)
            acc_i, acc_p, acc_g = carry
            return (acc_i + _reduce(pd * gt),
                    acc_p + _reduce(pd),
                    acc_g + _reduce(gt))

        zero = jnp.zeros((_SUB, _LANE), jnp.float32)
        inter, s_pd, s_gt = lax.fori_loop(
            0, n_chunks, body, (zero, zero, zero), unroll=min(8, n_chunks))
        acc_ref[0] += inter
        acc_ref[1] += s_pd
        acc_ref[2] += s_gt

    if not needs_mask:
        _accumulate(masked=False)
    else:
        # Only the final (partial) block pays for the iota/compare/selects.
        @pl.when(k < num_blocks - 1)
        def _interior():
            _accumulate(masked=False)

        @pl.when(k == num_blocks - 1)
        def _boundary():
            _accumulate(masked=True)


def dice_loss(output, target, smooth=1e-05):
    """Pallas TPU implementation of DiceLoss.forward(output, target, smooth)."""
    flat_pd = output.reshape(-1)
    flat_gt = target.reshape(-1)
    n = flat_pd.shape[0]

    rows = n // _LANE        # full 128-lane rows handled by the kernel
    main = rows * _LANE

    itemsize = max(flat_pd.dtype.itemsize, flat_gt.dtype.itemsize)
    pack = max(1, 4 // itemsize)   # sub-32-bit sublane packing factor
    gran = _SUB * pack             # 8 (f32) / 16 (bf16) / 32 (int8)

    if rows < gran:
        # Tiny input: not worth a kernel launch; pure jnp.
        y_pd = flat_pd.astype(jnp.float32)
        y_gt = flat_gt.astype(jnp.float32)
        sums = jnp.stack([jnp.sum(y_pd * y_gt), jnp.sum(y_pd), jnp.sum(y_gt)])
    else:
        # Sub-row tail (< 128 elements): tiny jnp reduction.
        if main < n:
            t_pd = flat_pd[main:].astype(jnp.float32)
            t_gt = flat_gt[main:].astype(jnp.float32)
            tail = jnp.stack([jnp.sum(t_pd * t_gt), jnp.sum(t_pd), jnp.sum(t_gt)])
        else:
            tail = jnp.zeros((3,), jnp.float32)

        # TODO(synk): when n % 128 != 0 this slice materializes a ~n-element
        # copy before the kernel; allow_input_fusion or an in-kernel ragged
        # path would remove it.
        pd2 = (flat_pd if main == n else flat_pd[:main]).reshape(rows, _LANE)
        gt2 = (flat_gt if main == n else flat_gt[:main]).reshape(rows, _LANE)

        # Tile sizing: ~4 MiB of DMA per input per grid step (dtype-scaled)
        # keeps the ~0.35 us per-step overhead at <~10% of the step's DMA time
        # while 2 inputs x 2 buffers x 4 MiB = 16 MiB stays under the raised
        # VMEM limit on every generation.
        target_rows = max(64, (_TARGET_TILE_BYTES // (_LANE * itemsize)) // 64 * 64)
        if rows >= target_rows:
            block_rows, chunk_rows = target_rows, 64
        else:
            block_rows = (rows // gran) * gran        # <= rows, tiling-legal
            chunk_rows = 64 if block_rows % 64 == 0 else gran
        num_blocks = -(-rows // block_rows)
        needs_mask = (rows % block_rows) != 0          # last block is partial

        kernel = functools.partial(
            _dice_kernel, rows=rows, block_rows=block_rows,
            chunk_rows=chunk_rows, num_blocks=num_blocks, needs_mask=needs_mask)

        partials = pl.pallas_call(
            kernel,
            out_shape=jax.ShapeDtypeStruct((3, _SUB, _LANE), jnp.float32),
            grid_spec=pltpu.PrefetchScalarGridSpec(
                num_scalar_prefetch=0,
                grid=(num_blocks,),
                in_specs=[
                    pl.BlockSpec((block_rows, _LANE), lambda k: (k, 0)),
                    pl.BlockSpec((block_rows, _LANE), lambda k: (k, 0)),
                ],
                out_specs=pl.BlockSpec((3, _SUB, _LANE), lambda k: (0, 0, 0)),
            ),
            compiler_params=pltpu.CompilerParams(
                dimension_semantics=("arbitrary",),
                vmem_limit_bytes=_VMEM_LIMIT_BYTES),
            cost_estimate=pl.CostEstimate(
                flops=4 * main,
                transcendentals=0,
                bytes_accessed=main * (flat_pd.dtype.itemsize
                                       + flat_gt.dtype.itemsize)
                + 3 * _SUB * _LANE * 4),
        )(pd2, gt2)

        sums = jnp.sum(partials, axis=(1, 2)) + tail

    intersection, s_pd, s_gt = sums[0], sums[1], sums[2]
    score = (2.0 * intersection + smooth) / (s_pd + s_gt + smooth)
    return 1.0 - score


def _dice_ref(output, target, smooth=1e-05):
    """Pure-JAX reference matching the PyTorch semantics."""
    y_pd = output.reshape(-1).astype(jnp.float32)
    y_gt = target.reshape(-1).astype(jnp.float32)
    intersection = jnp.sum(y_pd * y_gt)
    score = (2.0 * intersection + smooth) / (jnp.sum(y_pd) + jnp.sum(y_gt) + smooth)
    return 1.0 - score


if __name__ == "__main__":
    key = jax.random.PRNGKey(0)
    k1, k2 = jax.random.split(key)

    # small NCHW-like shapes: batch=2, channels=4, spatial=16x16
    shape = (2, 4, 16, 16)
    # "predictions" in [0, 1], "targets" as hard 0/1 mask
    output = jax.nn.sigmoid(jax.random.normal(k1, shape, dtype=jnp.float32))
    target = (jax.random.uniform(k2, shape, dtype=jnp.float32) > 0.5).astype(
        jnp.float32)

    loss = dice_loss(output, target)
    loss = jax.block_until_ready(loss)

    ref = _dice_ref(output, target)
    assert jnp.allclose(loss, ref, rtol=1e-5, atol=1e-6), (loss, ref)

    print("KERNEL_OK")
</pallas_src>

<mosaic_0001>
module attributes {stable_mosaic.version = 11 : i64} {
  func.func @_dice_kernel(%arg0: i32, %arg1: memref<16x128xf32, #tpu.memory_space<vmem>>, %arg2: memref<16x128xf32, #tpu.memory_space<vmem>>, %arg3: memref<3x8x128xf32, #tpu.memory_space<vmem>>) attributes {dimension_semantics = [#tpu.dimension_semantics<arbitrary>], iteration_bounds = array<i64: 1>, scalar_prefetch = 0 : i64, scratch_operands = 0 : i64, tpu.core_type = #tpu.core_type<tc>, window_params = [{transform_indices = @transform_0, window_bounds = array<i64: 16, 128>}, {transform_indices = @transform_1, window_bounds = array<i64: 16, 128>}, {pipeline_mode = #tpu.pipeline_mode<synchronous>, transform_indices = @transform_2, window_bounds = array<i64: 3, 8, 128>}]} {
    %c0_i32 = arith.constant 0 : i32
    %0 = arith.cmpi eq, %arg0, %c0_i32 : i32
    %1 = arith.extui %0 : i1 to i32
    %c0_i32_0 = arith.constant 0 : i32
    %2 = arith.cmpi ne, %1, %c0_i32_0 : i32
    scf.if %2 {
      %cst_28 = arith.constant 0.000000e+00 : f32
      %54 = vector.broadcast %cst_28 : f32 to vector<3x8x128xf32>
      %c0_29 = arith.constant 0 : index
      %c0_30 = arith.constant 0 : index
      %c0_31 = arith.constant 0 : index
      %55 = vector.load %arg3[%c0_29, %c0_30, %c0_31] : memref<3x8x128xf32, #tpu.memory_space<vmem>>, vector<3x8x128xf32>
      tpu.vector_store %arg3[%c0_29, %c0_30, %c0_31], %54 {strides = array<i32>} : memref<3x8x128xf32, #tpu.memory_space<vmem>>, vector<3x8x128xf32>,
    } else {
    }
    %cst = arith.constant 0.000000e+00 : f32
    %3 = vector.broadcast %cst : f32 to vector<8x128xf32>
    %c0_i32_1 = arith.constant 0 : i32
    %c8_i32 = arith.constant 8 : i32
    %4 = arith.muli %c0_i32_1, %c8_i32 : i32
    %5 = tpu.assume_multiple %4, 8 : i32
    %6 = arith.index_cast %5 : i32 to index
    %c0 = arith.constant 0 : index
    %7 = vector.load %arg1[%6, %c0] : memref<16x128xf32, #tpu.memory_space<vmem>>, vector<8x128xf32>
    %8 = arith.index_cast %5 : i32 to index
    %c0_2 = arith.constant 0 : index
    %9 = vector.load %arg2[%8, %c0_2] : memref<16x128xf32, #tpu.memory_space<vmem>>, vector<8x128xf32>
    %10 = arith.mulf %7, %9 : vector<8x128xf32>
    %11 = vector.shape_cast %10 : vector<8x128xf32> to vector<1x8x128xf32>
    %cst_3 = arith.constant dense<0.000000e+00> : vector<8x128xf32>
    %12 = vector.multi_reduction <add>, %11, %cst_3 [0] : vector<1x8x128xf32> to vector<8x128xf32>
    %13 = arith.addf %3, %12 : vector<8x128xf32>
    %14 = vector.shape_cast %7 : vector<8x128xf32> to vector<1x8x128xf32>
    %cst_4 = arith.constant dense<0.000000e+00> : vector<8x128xf32>
    %15 = vector.multi_reduction <add>, %14, %cst_4 [0] : vector<1x8x128xf32> to vector<8x128xf32>
    %16 = arith.addf %3, %15 : vector<8x128xf32>
    %17 = vector.shape_cast %9 : vector<8x128xf32> to vector<1x8x128xf32>
    %cst_5 = arith.constant dense<0.000000e+00> : vector<8x128xf32>
    %18 = vector.multi_reduction <add>, %17, %cst_5 [0] : vector<1x8x128xf32> to vector<8x128xf32>
    %19 = arith.addf %3, %18 : vector<8x128xf32>
    %c1_i32 = arith.constant 1 : i32
    %c8_i32_6 = arith.constant 8 : i32
    %20 = arith.muli %c1_i32, %c8_i32_6 : i32
    %21 = tpu.assume_multiple %20, 8 : i32
    %22 = arith.index_cast %21 : i32 to index
    %c0_7 = arith.constant 0 : index
    %23 = vector.load %arg1[%22, %c0_7] : memref<16x128xf32, #tpu.memory_space<vmem>>, vector<8x128xf32>
    %24 = arith.index_cast %21 : i32 to index
    %c0_8 = arith.constant 0 : index
    %25 = vector.load %arg2[%24, %c0_8] : memref<16x128xf32, #tpu.memory_space<vmem>>, vector<8x128xf32>
    %26 = arith.mulf %23, %25 : vector<8x128xf32>
    %27 = vector.shape_cast %26 : vector<8x128xf32> to vector<1x8x128xf32>
    %cst_9 = arith.constant dense<0.000000e+00> : vector<8x128xf32>
    %28 = vector.multi_reduction <add>, %27, %cst_9 [0] : vector<1x8x128xf32> to vector<8x128xf32>
    %29 = arith.addf %13, %28 : vector<8x128xf32>
    %30 = vector.shape_cast %23 : vector<8x128xf32> to vector<1x8x128xf32>
    %cst_10 = arith.constant dense<0.000000e+00> : vector<8x128xf32>
    %31 = vector.multi_reduction <add>, %30, %cst_10 [0] : vector<1x8x128xf32> to vector<8x128xf32>
    %32 = arith.addf %16, %31 : vector<8x128xf32>
    %33 = vector.shape_cast %25 : vector<8x128xf32> to vector<1x8x128xf32>
    %cst_11 = arith.constant dense<0.000000e+00> : vector<8x128xf32>
    %34 = vector.multi_reduction <add>, %33, %cst_11 [0] : vector<1x8x128xf32> to vector<8x128xf32>
    %35 = arith.addf %19, %34 : vector<8x128xf32>
    %c2_i32 = arith.constant 2 : i32
    %c0_12 = arith.constant 0 : index
    %c0_13 = arith.constant 0 : index
    %c0_14 = arith.constant 0 : index
    %36 = vector.load %arg3[%c0_12, %c0_13, %c0_14] : memref<3x8x128xf32, #tpu.memory_space<vmem>>, vector<1x8x128xf32>
    %37 = vector.shape_cast %36 : vector<1x8x128xf32> to vector<8x128xf32>
    %38 = arith.addf %37, %29 : vector<8x128xf32>
    %c0_15 = arith.constant 0 : index
    %c0_16 = arith.constant 0 : index
    %c0_17 = arith.constant 0 : index
    %39 = vector.load %arg3[%c0_15, %c0_16, %c0_17] : memref<3x8x128xf32, #tpu.memory_space<vmem>>, vector<1x8x128xf32>
    %40 = vector.shape_cast %39 : vector<1x8x128xf32> to vector<8x128xf32>
    %41 = vector.shape_cast %38 : vector<8x128xf32> to vector<1x8x128xf32>
    tpu.vector_store %arg3[%c0_15, %c0_16, %c0_17], %41 {strides = array<i32>} : memref<3x8x128xf32, #tpu.memory_space<vmem>>, vector<1x8x128xf32>,
    %c1 = arith.constant 1 : index
    %c0_18 = arith.constant 0 : index
    %c0_19 = arith.constant 0 : index
    %42 = vector.load %arg3[%c1, %c0_18, %c0_19] : memref<3x8x128xf32, #tpu.memory_space<vmem>>, vector<1x8x128xf32>
    %43 = vector.shape_cast %42 : vector<1x8x128xf32> to vector<8x128xf32>
    %44 = arith.addf %43, %32 : vector<8x128xf32>
    %c1_20 = arith.constant 1 : index
    %c0_21 = arith.constant 0 : index
    %c0_22 = arith.constant 0 : index
    %45 = vector.load %arg3[%c1_20, %c0_21, %c0_22] : memref<3x8x128xf32, #tpu.memory_space<vmem>>, vector<1x8x128xf32>
    %46 = vector.shape_cast %45 : vector<1x8x128xf32> to vector<8x128xf32>
    %47 = vector.shape_cast %44 : vector<8x128xf32> to vector<1x8x128xf32>
    tpu.vector_store %arg3[%c1_20, %c0_21, %c0_22], %47 {strides = array<i32>} : memref<3x8x128xf32, #tpu.memory_space<vmem>>, vector<1x8x128xf32>,
    %c2 = arith.constant 2 : index
    %c0_23 = arith.constant 0 : index
    %c0_24 = arith.constant 0 : index
    %48 = vector.load %arg3[%c2, %c0_23, %c0_24] : memref<3x8x128xf32, #tpu.memory_space<vmem>>, vector<1x8x128xf32>
    %49 = vector.shape_cast %48 : vector<1x8x128xf32> to vector<8x128xf32>
    %50 = arith.addf %49, %35 : vector<8x128xf32>
    %c2_25 = arith.constant 2 : index
    %c0_26 = arith.constant 0 : index
    %c0_27 = arith.constant 0 : index
    %51 = vector.load %arg3[%c2_25, %c0_26, %c0_27] : memref<3x8x128xf32, #tpu.memory_space<vmem>>, vector<1x8x128xf32>
    %52 = vector.shape_cast %51 : vector<1x8x128xf32> to vector<8x128xf32>
    %53 = vector.shape_cast %50 : vector<8x128xf32> to vector<1x8x128xf32>
    tpu.vector_store %arg3[%c2_25, %c0_26, %c0_27], %53 {strides = array<i32>} : memref<3x8x128xf32, #tpu.memory_space<vmem>>, vector<1x8x128xf32>,
    return
  }
  func.func @transform_0(%arg0: i32) -> (i32, i32) {
    %c0_i32 = arith.constant 0 : i32
    %c0_i32_0 = arith.constant 0 : i32
    return %arg0, %c0_i32 : i32, i32
  }
  func.func @transform_1(%arg0: i32) -> (i32, i32) {
    %c0_i32 = arith.constant 0 : i32
    %c0_i32_0 = arith.constant 0 : i32
    return %arg0, %c0_i32 : i32, i32
  }
  func.func @transform_2(%arg0: i32) -> (i32, i32, i32) {
    %c0_i32 = arith.constant 0 : i32
    %c0_i32_0 = arith.constant 0 : i32
    %c0_i32_1 = arith.constant 0 : i32
    %c0_i32_2 = arith.constant 0 : i32
    return %c0_i32, %c0_i32_0, %c0_i32_1 : i32, i32, i32
  }
}

</mosaic_0001>

<llo_original>
// kernel: tpu_custom_call.1
$region0: #{tpu_custom_call.1}
  #allocation0 [shape = 'u32[]', space=smem, size = 0x4, offset = 0x4, fixed_abs, tag = 'smem constant byte address 0x4 - core index']
  #allocation1 [shape = 'u32[144,128]{1,0:T(1,128)}', space=vmem, size = 0x12000, scoped, tag = 'internal scratch']
  %s0 = inlined_call_operand.hbm [shape: f32[16,128], index: 0, kind: input, shape index: {}]
  %s1 = inlined_call_operand.hbm [shape: f32[16,128], index: 1, kind: input, shape index: {}]
  %s2 = inlined_call_operand.hbm [shape: f32[3,8,128], index: 2, kind: output, shape index: {}]
  %s3 = sld [smem:[#allocation0]]
  $region30: #{tpu_custom_call.1} parent=0
    _
  %s5 = ssub.s32 1, %s3
  %s6 = scalar_select 0, %s5, %s3
  $region1: #{tpu_custom_call.1} parent=0
    #allocation2 [shape = 'u8[8192]{0}', space=vmem, size = 0x2000, scoped, tag = 'input window, operand 0, single buffered']
    #allocation3 [shape = 's32[1]{0}', space=sflag, size = 0x4, scoped, tag = 'scoped memory for tpu_custom_call.1']
    #allocation4 [shape = 's32[1]{0}', space=sflag, size = 0x4, scoped, tag = 'scoped memory for tpu_custom_call.1']
    #allocation5 [shape = 'u8[8192]{0}', space=vmem, size = 0x2000, scoped, tag = 'input window, operand 1, single buffered']
    #allocation6 [shape = 's32[1]{0}', space=sflag, size = 0x4, scoped, tag = 'scoped memory for tpu_custom_call.1']
    #allocation7 [shape = 'u8[12288]{0}', space=vmem, size = 0x3000, scoped, tag = 'output window, operand 0, single buffered']
    %7 = vsyncpa [#allocation3], 0
    %8 = vsyncpa [#allocation6], 0
    %9 = vsyncpa [#allocation4], 0
    // Predicated region
    $region2: #{tpu_custom_call.1} parent=1 // pred_check
      _
    $region3: #{tpu_custom_call.1} parent=1 // pred_check_branch
      %11 = sbr.rel (0) target = $region5
    $region4: #{tpu_custom_call.1} parent=1 // pred_region
      %s13 = ssub.s32 256, 256
      %14 = vsyncadd [#allocation3], %s13
      %s15 = sshll.u32 [#allocation2], 4
      %s16 = int_to_ptr.vmem [resolvable:$true] %s15
      %21 = dma.hbm_to_vmem [thread:$0]  %s0, 256, %s16, [#allocation3], 128, 128, 8
    $region5: #{tpu_custom_call.1} parent=1 // pred_fallthru
      _
    // Predicated region
    $region6: #{tpu_custom_call.1} parent=1 // pred_check
      _
    $region7: #{tpu_custom_call.1} parent=1 // pred_check_branch
      %23 = sbr.rel (0) target = $region9
    $region8: #{tpu_custom_call.1} parent=1 // pred_region
      %s25 = ssub.s32 256, 256
      %26 = vsyncadd [#allocation6], %s25
      %s27 = sshll.u32 [#allocation5], 4
      %s28 = int_to_ptr.vmem [resolvable:$true] %s27
      %33 = dma.hbm_to_vmem [thread:$0]  %s1, 256, %s28, [#allocation6], 128, 128, 8
    $region9: #{tpu_custom_call.1} parent=1 // pred_fallthru
      _
    // Predicated region
    $region10: #{tpu_custom_call.1} parent=1 // pred_check
      _
    $region11: #{tpu_custom_call.1} parent=1 // pred_check_branch
      %35 = sbr.rel (0) target = $region13
    $region12: #{tpu_custom_call.1} parent=1 // pred_region
      %36 = dma.done [#allocation3], 256
    $region13: #{tpu_custom_call.1} parent=1 // pred_fallthru
      _
    // Predicated region
    $region14: #{tpu_custom_call.1} parent=1 // pred_check
      _
    $region15: #{tpu_custom_call.1} parent=1 // pred_check_branch
      %38 = sbr.rel (0) target = $region17
    $region16: #{tpu_custom_call.1} parent=1 // pred_region
      %39 = dma.done [#allocation6], 256
    $region17: #{tpu_custom_call.1} parent=1 // pred_fallthru
      _
    %p40 = scmp.eq.s32.totalorder 0, 0
    // Predicated region
    $region18: #{tpu_custom_call.1} parent=1 // pred_check
      %p41 = pneg %p40
    $region19: #{tpu_custom_call.1} parent=1 // pred_check_branch
      %43 = sbr.rel (%p41) target = $region21
    $region20: #{tpu_custom_call.1} parent=1 // pred_region
      %44 = vst [vmem:[#allocation7] sm:$0xff] 0.0
      %45 = vst [vmem:[#allocation7 + $0x8] sm:$0xff] 0.0
      %46 = vst [vmem:[#allocation7 + $0x10] sm:$0xff] 0.0
    $region21: #{tpu_custom_call.1} parent=1 // pred_fallthru
      _
    %v47 = vld [vmem:[#allocation2] sm:$0xff]
    %v48 = vld [vmem:[#allocation5] sm:$0xff]
    %v49 = vmul.f32 %v47, %v48
    %v50 = vadd.f32 %v49, 0.0
    %v51 = vadd.f32 %v50, 0.0
    %v52 = vadd.f32 %v47, 0.0
    %v53 = vadd.f32 %v52, 0.0
    %v54 = vadd.f32 %v48, 0.0
    %v55 = vadd.f32 %v54, 0.0
    %s56 = scalar_lea.vmem [#allocation2], 8
    %v57 = vld [vmem:[%s56] sm:$0xff]
    %s58 = scalar_lea.vmem [#allocation5], 8
    %v59 = vld [vmem:[%s58] sm:$0xff]
    %v60 = vmul.f32 %v57, %v59
    %v61 = vadd.f32 %v60, 0.0
    %v62 = vadd.f32 %v51, %v61
    %v63 = vadd.f32 %v57, 0.0
    %v64 = vadd.f32 %v53, %v63
    %v65 = vadd.f32 %v59, 0.0
    %v66 = vadd.f32 %v55, %v65
    %v67 = vld [vmem:[#allocation7] sm:$0xff]
    %v68 = vadd.f32 %v67, %v62
    %69 = vst [vmem:[#allocation7] sm:$0xff] %v68
    %s70 = scalar_lea.vmem [#allocation7], 8
    %v71 = vld [vmem:[%s70] sm:$0xff]
    %v72 = vadd.f32 %v71, %v64
    %73 = vst [vmem:[%s70] sm:$0xff] %v72
    %s74 = scalar_lea.vmem [#allocation7], 16
    %v75 = vld [vmem:[%s74] sm:$0xff]
    %v76 = vadd.f32 %v75, %v66
    %77 = vst [vmem:[%s74] sm:$0xff] %v76
    // Predicated region
    $region22: #{tpu_custom_call.1} parent=1 // pred_check
      _
    $region23: #{tpu_custom_call.1} parent=1 // pred_check_branch
      %79 = sbr.rel (0) target = $region25
    $region24: #{tpu_custom_call.1} parent=1 // pred_region
      %s81 = ssub.s32 384, 384
      %82 = vsyncadd [#allocation4], %s81
      %s83 = sshll.u32 [#allocation7], 4
      %s84 = int_to_ptr.vmem [resolvable:$true] %s83
      %89 = dma.vmem_to_hbm [thread:$0]  %s84, 384, %s2, [#allocation4], 128, 128, 8
    $region25: #{tpu_custom_call.1} parent=1 // pred_fallthru
      _
    // Predicated region
    $region26: #{tpu_custom_call.1} parent=1 // pred_check
      _
    $region27: #{tpu_custom_call.1} parent=1 // pred_check_branch
      %91 = sbr.rel (0) target = $region29
    $region28: #{tpu_custom_call.1} parent=1 // pred_region
      %92 = dma.done [#allocation4], 384
    $region29: #{tpu_custom_call.1} parent=1 // pred_fallthru
      _
    %93 = vsyncpa [#allocation3], 1
    %94 = vsyncpa [#allocation6], 1
    %95 = vsyncpa [#allocation4], 1

</llo_original>
